<compile_context>
chip_gen: v7x
topology: tpu7x:2x2x1
jax: 0.10.0
libtpu: 0.0.40
codegen_flags: <defaults>
</compile_context>

<pallas_src>
import jax
import jax.numpy as jnp
from jax.experimental import pallas as pl
from jax.experimental.pallas import tpu as pltpu

MAX_INFLIGHT_DMAS = 4          # max concurrent HBM->HBM DMA streams
MIN_CHUNK_BYTES = 64 * 1024    # don't split into chunks smaller than this


def _resolve_shape(total, shape):
    """torch.view-style shape resolution (supports a single -1)."""
    shape = list(shape)
    if shape.count(-1) > 1:
        raise ValueError("only one -1 allowed in view shape")
    if -1 in shape:
        known = 1
        for s in shape:
            if s != -1:
                known *= s
        if known == 0 or total % known != 0:
            raise ValueError(f"cannot view {total} elements as {shape}")
        shape[shape.index(-1)] = total // known
    prod = 1
    for s in shape:
        prod *= s
    if prod != total:
        raise ValueError(f"shape {tuple(shape)} invalid for {total} elements")
    return tuple(shape)


def _split_chunks(out_shape, itemsize):
    """Static (start, rows) chunks along dim 0 for concurrent DMA streams."""
    dim0 = out_shape[0]
    row_elems = 1
    for s in out_shape[1:]:
        row_elems *= s
    row_bytes = max(1, row_elems * itemsize)
    # At most MAX_INFLIGHT_DMAS chunks, each at least MIN_CHUNK_BYTES, never
    # more chunks than rows; small arrays collapse to a single full-ref DMA.
    n = min(MAX_INFLIGHT_DMAS, dim0,
            max(1, (dim0 * row_bytes) // MIN_CHUNK_BYTES))
    n = max(1, n)
    per = -(-dim0 // n)  # ceil
    chunks = []
    start = 0
    while start < dim0:
        size = min(per, dim0 - start)   # last chunk may be ragged
        chunks.append((start, size))
        start += size
    return tuple(chunks)


def _make_dma_copy_kernel(chunks, full_copy):
    """Identity copy out[...] = in[...] via chunked HBM->HBM async DMAs."""

    def kernel(x_hbm, o_hbm, sems):
        copies = []
        if full_copy:
            # Whole array in one DMA descriptor.
            copies.append(pltpu.make_async_copy(x_hbm, o_hbm, sems.at[0]))
        else:
            for idx, (start, size) in enumerate(chunks):
                copies.append(
                    pltpu.make_async_copy(
                        x_hbm.at[pl.ds(start, size)],
                        o_hbm.at[pl.ds(start, size)],
                        sems.at[idx],
                    )
                )
        for cp in copies:   # launch all DMAs first -> concurrent streams
            cp.start()
        for cp in copies:   # then drain
            cp.wait()

    return kernel


def _pallas_identity_copy(y):
    """Materialize a copy of `y` (rank >= 1) with an HBM->HBM DMA kernel."""
    itemsize = jnp.dtype(y.dtype).itemsize
    nbytes = y.size * itemsize
    chunks = _split_chunks(y.shape, itemsize)
    full_copy = len(chunks) == 1
    n_sems = len(chunks)

    return pl.pallas_call(
        _make_dma_copy_kernel(chunks, full_copy),
        out_shape=jax.ShapeDtypeStruct(y.shape, y.dtype),
        in_specs=[pl.BlockSpec(memory_space=pl.ANY)],    # stay in HBM
        out_specs=pl.BlockSpec(memory_space=pl.ANY),     # stay in HBM
        scratch_shapes=[pltpu.SemaphoreType.DMA((n_sems,))],
        cost_estimate=pl.CostEstimate(
            flops=0, transcendentals=0, bytes_accessed=2 * nbytes),
    )(y)


def pallas_reshape(x, *shape, force_copy=False):
    """Equivalent of torch Reshape(*shape)(x): x.view(*shape).

    Default (force_copy=False): zero-copy metadata reshape — what .view()
    means for a contiguous tensor.  force_copy=True materializes the result
    through a chunked HBM->HBM DMA Pallas kernel (2x total bytes of HBM
    traffic, the floor for any real copy).
    """
    total = x.size
    out_shape = _resolve_shape(total, shape)

    y = jnp.reshape(x, out_shape)      # the actual "view" (metadata / XLA)
    if not force_copy or total == 0:
        return y
    if y.ndim == 0:                    # scalar view: copy the 1-element flat
        return _pallas_identity_copy(y.reshape(1)).reshape(())
    return _pallas_identity_copy(y)


class Reshape:
    """Drop-in analogue of the PyTorch module."""

    def __init__(self, *shape, force_copy=False):
        self.shape = shape
        self.force_copy = force_copy

    def __call__(self, x):
        return pallas_reshape(x, *self.shape, force_copy=self.force_copy)


if __name__ == "__main__":
    key = jax.random.PRNGKey(0)
    k0, k1, k2 = jax.random.split(key, 3)

    # 1) Reshape(2, -1, 256): (2, 4, 16, 16) -> (2, 4, 256)
    #    Small array -> single full-ref HBM->HBM DMA.
    x = jax.random.normal(k0, (2, 4, 16, 16), dtype=jnp.float32)
    reshape_mod = Reshape(2, -1, 256, force_copy=True)
    y = jax.block_until_ready(reshape_mod(x))
    ref = x.reshape(2, 4, 256)
    assert y.shape == (2, 4, 256) and y.dtype == x.dtype
    assert bool(jnp.all(y == ref))

    # Default zero-copy path gives the identical result with no kernel.
    y0 = jax.block_until_ready(pallas_reshape(x, 2, -1, 256))
    assert y0.shape == (2, 4, 256) and bool(jnp.all(y0 == ref))

    # 2) Multi-chunk path with a ragged last chunk:
    #    (7, 4, 64, 32) f32 (~224 KiB) -> (7, 8192): 3 concurrent DMAs of
    #    3 + 3 + 1 rows (exercises the uneven final chunk).
    x2 = jax.random.normal(k1, (7, 4, 64, 32), dtype=jnp.float32)
    y2 = jax.block_until_ready(pallas_reshape(x2, 7, -1, force_copy=True))
    assert y2.shape == (7, 4 * 64 * 32)
    assert bool(jnp.all(y2 == x2.reshape(7, -1)))

    # 3) Ragged, non-multiple-of-128, packed dtype: (3, 5, 7) bf16 -> (105,)
    #    copied exactly by one DMA — no host-side pad/concat or slice.
    x3 = jax.random.normal(k2, (3, 5, 7), dtype=jnp.bfloat16)
    y3 = jax.block_until_ready(pallas_reshape(x3, -1, force_copy=True))
    assert y3.shape == (105,) and y3.dtype == x3.dtype
    assert bool(jnp.all(y3 == x3.reshape(-1)))

    print("KERNEL_OK")
</pallas_src>

<mosaic_0001>
module attributes {stable_mosaic.version = 11 : i64} {
  func.func @kernel(%arg0: memref<2x4x256xf32, #tpu.memory_space<any>>, %arg1: memref<2x4x256xf32, #tpu.memory_space<any>>, %arg2: memref<1x!tpu.dma_semaphore, #tpu.memory_space<semaphore_mem>>) attributes {dimension_semantics = [], scalar_prefetch = 0 : i64, scratch_operands = 1 : i64, tpu.core_type = #tpu.core_type<tc>} {
    %c0_i32 = arith.constant 0 : i32
    %0 = tpu.memref_slice %arg2[%c0_i32] : memref<1x!tpu.dma_semaphore, #tpu.memory_space<semaphore_mem>> -> memref<1x!tpu.dma_semaphore, #tpu.memory_space<semaphore_mem>>
    %1 = tpu.memref_squeeze %0 : memref<1x!tpu.dma_semaphore, #tpu.memory_space<semaphore_mem>> -> memref<!tpu.dma_semaphore, #tpu.memory_space<semaphore_mem>>
    tpu.enqueue_dma source(%arg0 : memref<2x4x256xf32, #tpu.memory_space<any>>) target(%arg1 : memref<2x4x256xf32, #tpu.memory_space<any>>) target_semaphore(%1 : memref<!tpu.dma_semaphore, #tpu.memory_space<semaphore_mem>>)
    %c0_i32_0 = arith.constant 0 : i32
    %2 = tpu.memref_slice %arg2[%c0_i32_0] : memref<1x!tpu.dma_semaphore, #tpu.memory_space<semaphore_mem>> -> memref<1x!tpu.dma_semaphore, #tpu.memory_space<semaphore_mem>>
    %3 = tpu.memref_squeeze %2 : memref<1x!tpu.dma_semaphore, #tpu.memory_space<semaphore_mem>> -> memref<!tpu.dma_semaphore, #tpu.memory_space<semaphore_mem>>
    tpu.wait_dma2 semaphore(%3 : memref<!tpu.dma_semaphore, #tpu.memory_space<semaphore_mem>>) src(%arg0 : memref<2x4x256xf32, #tpu.memory_space<any>>) dst(%arg1 : memref<2x4x256xf32, #tpu.memory_space<any>>)
    return
  }
}

</mosaic_0001>

<llo_original>
// kernel: tpu_custom_call.1
$region0: #{tpu_custom_call.1}
  #allocation0 [shape = 'u32[]', space=smem, size = 0x4, offset = 0x4, fixed_abs, tag = 'smem constant byte address 0x4 - core index']
  #allocation1 [shape = 'u32[144,128]{1,0:T(1,128)}', space=vmem, size = 0x12000, scoped, tag = 'internal scratch']
  #allocation2 [shape = 's32[1]{0}', space=sflag, size = 0x4, scoped, tag = 'scratch operand']
  #allocation3 [shape = 's32[]', space=sflag, size = 0x4, offset = 0, fixed_abs, tag = 'sflag constant byte address 0x0 - dummy sync flag']
  #allocation4 [shape = 'u32[0]{0}', space=smem, size = 0, offset = 0, fixed_abs, tag = 'smem constant byte address 0x0 - null']
  %s0 = inlined_call_operand.hbm [shape: f32[2,4,256], index: 0, kind: input, shape index: {}]
  %s1 = inlined_call_operand.hbm [shape: f32[2,4,256], index: 1, kind: output, shape index: {}]
  %s2 = sld [smem:[#allocation0]]
  $region2: #{tpu_custom_call.1} parent=0
    _
  %s4 = ssub.s32 1, %s2
  %s5 = scalar_select 0, %s4, %s2
  %s7 = sshll.u32 1, 14
  %s8 = sxor.u32 4294967295, %s7
  %s11 = sshll.u32 3, 24
  %s12 = sxor.u32 4294967295, %s11
  %s13 = sand.u32 0, %s12
  %s15 = sor.u32 %s13, 0
  %18 = dma.general %s0, 256, %s1, [#allocation2], [#allocation3], [#allocation4], %s15, 0
  %s19 = smul.u32 4, 2
  %s20 = smul.u32 %s19, 1
  %s21 = smul.u32 %s20, 2
  %s22 = sshll.u32 %s21, 4
  %23 = dma.done [#allocation2], %s22
  %24 = vsyncmov [#allocation2]
  %s25 = vpop.sfrf %24
  %p26 = scmp.eq.s32.totalorder %s25, 0
  %p27 = pneg %p26
  %29 = shalt.err (%p27)

</llo_original>
